<compile_context>
chip_gen: v7x
topology: tpu7x:2x2x1
jax: 0.10.0
libtpu: 0.0.40
codegen_flags: <defaults>
</compile_context>

<pallas_src>
import math

import jax
import jax.numpy as jnp
from jax import lax
from jax.experimental import pallas as pl
from jax.experimental.pallas import tpu as pltpu

_VMEM = pltpu.MemorySpace.VMEM
_SMEM = pltpu.MemorySpace.SMEM

_EPS = 1e-4                      # torch _sigmoid clamp
_LOG_EPS = math.log(_EPS)
_LOG_1M_EPS = math.log(1.0 - _EPS)

_REG_HEADS = ('reg', 'tracking', 'ltrb', 'ltrb_amodal', 'hps', 'dep', 'dim')
_BAL_HEADS = ('wh',)


# ----------------------------------------------------------------------------
# Tiling plan (generation aware, VMEM safe)
# ----------------------------------------------------------------------------
def _round_up(n, u):
    return ((n + u - 1) // u) * u


def _hm_tile_caps():
    """(row-tile cap, lane-tile cap, vmem_limit_bytes) per TPU generation."""
    try:
        kind = jax.devices()[0].device_kind.lower()
    except Exception:
        kind = ""
    if ("v5" in kind) or ("v6" in kind):
        # 128 MiB VMEM chips: ~8 MiB f32 blocks, 2 inputs x 2 buffers = 32 MiB.
        return 512, 4096, 64 * 1024 * 1024
    # v7x has only 64 MiB VMEM/TC (and is the dual-TC chip): ~4 MiB blocks.
    # Unknown chips also take this conservative setting.
    return 512, 2048, 40 * 1024 * 1024


def _plan_axis(n, unit, cap):
    """Pick a tile (multiple of `unit`, <= min(n, cap)) for an axis of length
    n >= unit.  Returns (tile, needs_edge_mask)."""
    if n % unit == 0 and n <= cap:
        return n, False
    if n > cap:
        # Prefer an exact divisor (multiple of unit) in (cap/2, cap].
        d = (cap // unit) * unit
        while d * 2 > cap and d >= unit:
            if n % d == 0:
                return d, False
            d -= unit
        return (cap // unit) * unit, True          # cdiv grid + edge masking
    # n <= cap, not a multiple of unit: tile <= n minimizing padded work.
    best_t, best_pad = unit, None
    t = unit
    while t <= n:
        pad = -(-n // t) * t - n
        if best_pad is None or pad < best_pad or (pad == best_pad and t > best_t):
            best_t, best_pad = t, pad
        t += unit
    return best_t, True


# ----------------------------------------------------------------------------
# Heatmap pixel kernel (tiled, pipelined, vreg-granularity partial sums)
# ----------------------------------------------------------------------------
def _make_hm_kernel(rows, hw, tr, tl, mask_rows, mask_cols):
    nsub = tr // 8

    def kernel(x_ref, gt_ref, part_ref):
        """part_ref block (1, 3, 8, tl):
             [0,0] partial sum log(1-p) * p^2 * (1-gt)^4     (negative focal)
             [0,1] partial sum over gt==1 of log(p)*(1-p)^2  (pixel positive)
             [0,2] partial count of pixels with gt == 1
        """
        i = pl.program_id(0)
        j = pl.program_id(1)

        @pl.when(j == 0)
        def _():
            part_ref[...] = jnp.zeros_like(part_ref)

        x = x_ref[...].astype(jnp.float32)      # cast in-kernel (bf16 welcome)
        gt = gt_ref[...].astype(jnp.float32)

        valid = None
        if mask_rows:
            rid = lax.broadcasted_iota(jnp.int32, (tr, tl), 0) + i * tr
            valid = rid < rows
        if mask_cols:
            cid = lax.broadcasted_iota(jnp.int32, (tr, tl), 1) + j * tl
            cv = cid < hw
            valid = cv if valid is None else jnp.logical_and(valid, cv)
        if valid is not None:
            # Scrub possibly-garbage data in the padded tail of boundary blocks
            # before any transcendental touches it; gt=0 kills the pos term.
            x = jnp.where(valid, x, 0.0)
            gt = jnp.where(valid, gt, 0.0)

        # log-sigmoid identities (1 exp + 1 log + 1 exp on the EUP, no divide):
        #   log(sigmoid(x))     = -(log(1+exp(-|x|)) + relu(-x))
        #   log(1 - sigmoid(x)) = -(log(1+exp(-|x|)) + relu( x))
        t = jnp.exp(-jnp.abs(x))
        log1p_t = jnp.log(1.0 + t)
        log_p = jnp.clip(-(log1p_t + jnp.maximum(-x, 0.0)), _LOG_EPS, _LOG_1M_EPS)
        log_1mp = jnp.clip(-(log1p_t + jnp.maximum(x, 0.0)), _LOG_EPS, _LOG_1M_EPS)
        p = jnp.exp(log_p)             # == torch clamp(sigmoid(x)) up to rounding

        neg_w = jnp.square(jnp.square(1.0 - gt))        # (1 - gt)^4, VPU only
        if valid is not None:
            neg_w = jnp.where(valid, neg_w, 0.0)
        pos_mask = (gt == 1.0).astype(jnp.float32)      # matches torch .eq(1)

        neg_loss = log_1mp * p * p * neg_w
        pos_loss = log_p * jnp.square(1.0 - p) * pos_mask

        def tile_sum(a):
            # (tr, tl) -> (8, tl): layout-preserving split of the sublane dim
            # followed by a leading-axis reduce == pure cross-vreg VPU adds.
            if nsub == 1:
                return a
            return a.reshape(nsub, 8, tl).sum(axis=0)

        part_ref[0, 0] = part_ref[0, 0] + tile_sum(neg_loss)
        part_ref[0, 1] = part_ref[0, 1] + tile_sum(pos_loss)
        part_ref[0, 2] = part_ref[0, 2] + tile_sum(pos_mask)

    return kernel


def _hm_pixel_losses_ref(hm_logits, gt_hm):
    # Degenerate-shape fallback (B*C < 8 or H*W < 128): plain JAX, tiny work.
    x = hm_logits.astype(jnp.float32)
    gt = gt_hm.astype(jnp.float32)
    p = jnp.clip(jax.nn.sigmoid(x), _EPS, 1.0 - _EPS)
    neg = jnp.sum(jnp.log(1.0 - p) * p * p * jnp.square(jnp.square(1.0 - gt)))
    pos_mask = (gt == 1.0).astype(jnp.float32)
    pos = jnp.sum(jnp.log(p) * jnp.square(1.0 - p) * pos_mask)
    return neg, pos, jnp.sum(pos_mask)


def hm_pixel_losses(hm_logits, gt_hm):
    B, C, H, W = hm_logits.shape
    rows, hw = B * C, H * W
    if rows < 8 or hw < 128:
        return _hm_pixel_losses_ref(hm_logits, gt_hm)

    x2 = hm_logits.reshape(rows, hw)       # no wrapper-side dtype cast
    g2 = gt_hm.reshape(rows, hw)

    cap_r, cap_l, vmem_limit = _hm_tile_caps()
    tr, mask_rows = _plan_axis(rows, 8, cap_r)
    tl, mask_cols = _plan_axis(hw, 128, cap_l)
    nrt = -(-rows // tr)
    nlt = -(-hw // tl)

    partials = pl.pallas_call(
        _make_hm_kernel(rows, hw, tr, tl, mask_rows, mask_cols),
        out_shape=jax.ShapeDtypeStruct((nrt, 3, 8, tl), jnp.float32),
        grid=(nrt, nlt),
        in_specs=[pl.BlockSpec((tr, tl), lambda i, j: (i, j)),
                  pl.BlockSpec((tr, tl), lambda i, j: (i, j))],
        out_specs=pl.BlockSpec((1, 3, 8, tl), lambda i, j: (i, 0, 0, 0)),
        compiler_params=pltpu.CompilerParams(
            dimension_semantics=("parallel", "arbitrary"),
            vmem_limit_bytes=vmem_limit),
    )(x2, g2)
    sums = jnp.sum(partials, axis=(0, 2, 3))            # (3,) tiny XLA reduce
    return sums[0], sums[1], sums[2]


# ----------------------------------------------------------------------------
# Fused small-tensor reductions (positive focal + all regression heads)
# ----------------------------------------------------------------------------
def _make_small_kernel(kinds, has_pos):
    n_jobs = len(kinds)

    def kernel(*refs):
        out_ref = refs[-1]
        idx = 0
        o = 0
        if has_pos:
            x = refs[0][...].astype(jnp.float32)
            m = refs[1][...].astype(jnp.float32)
            p = jnp.clip(jax.nn.sigmoid(x), _EPS, 1.0 - _EPS)
            out_ref[0] = jnp.sum(jnp.log(p) * jnp.square(1.0 - p) * m)
            out_ref[1] = jnp.sum(m)
            idx, o = 2, 2
        if n_jobs:
            pred = refs[idx][...].astype(jnp.float32)
            tgt = refs[idx + 1][...].astype(jnp.float32)
            msk = refs[idx + 2][...].astype(jnp.float32)
            # |pred - tgt| * mask == |pred*mask - tgt*mask| for 0/1 masks;
            # zero padding contributes exactly 0 for both loss kinds.
            diff = jnp.abs(pred - tgt) * msk
            for k, kind in enumerate(kinds):
                d = diff[k:k + 1, :]
                if kind == 'bal':
                    alpha, gamma, beta = 0.5, 1.5, 1.0
                    bcst = math.exp(gamma / alpha) - 1.0
                    loss = jnp.where(
                        d < beta,
                        alpha / bcst * (bcst * d + 1.0)
                        * jnp.log(bcst * d / beta + 1.0) - alpha * d,
                        gamma * d + gamma / bcst - alpha * beta)
                else:
                    loss = d
                out_ref[o + 2 * k] = jnp.sum(loss)
                out_ref[o + 2 * k + 1] = jnp.sum(msk[k:k + 1, :])
    return kernel


def fused_small_losses(pos_logits, pos_mask, jobs):
    """jobs: list of (head, kind, pred(B,M,C), tgt(B,M,C), msk(B,M,C))."""
    has_pos = pos_logits is not None
    arrays = []
    if has_pos:
        bm = pos_logits.shape[0] * pos_logits.shape[1]
        bm_pad = _round_up(max(bm, 1), 128)              # lane-dense padding
        x = jnp.zeros((1, bm_pad), pos_logits.dtype)
        x = x.at[0, :bm].set(pos_logits.reshape(bm))
        m = jnp.zeros((1, bm_pad), jnp.float32)
        m = m.at[0, :bm].set(pos_mask.reshape(bm).astype(jnp.float32))
        arrays += [x, m]

    kinds = [kind for (_h, kind, *_r) in jobs]
    if jobs:
        sizes = [int(p.size) for (_h, _k, p, _t, _m) in jobs]
        sz_pad = _round_up(max(sizes), 128)
        n_jobs = len(jobs)

        def slab(sel):
            s = jnp.zeros((n_jobs, sz_pad), jnp.float32)
            for k, job in enumerate(jobs):
                a = job[sel].reshape(-1).astype(jnp.float32)
                s = s.at[k, :a.shape[0]].set(a)
            return s

        arrays += [slab(2), slab(3), slab(4)]            # pred / tgt / mask slabs

    n_out = (2 if has_pos else 0) + 2 * len(jobs)
    if n_out == 0:
        return None
    return pl.pallas_call(
        _make_small_kernel(kinds, has_pos),
        out_shape=jax.ShapeDtypeStruct((n_out,), jnp.float32),
        in_specs=[pl.BlockSpec(memory_space=_VMEM)] * len(arrays),
        out_specs=pl.BlockSpec(memory_space=_SMEM),
    )(*arrays)


# ----------------------------------------------------------------------------
# Gathers (tiny; no full-feature-map transpose is ever materialized)
# TODO(synk): these could be folded into the fused small kernel with
# PrefetchScalarGridSpec + manual DMA; left as tiny XLA gathers for clarity.
# ----------------------------------------------------------------------------
def _gather_feat_nchw(feat, ind):
    """feat (B, C, H, W), ind (B, M) flat spatial index -> (B, M, C)."""
    B, C, H, W = feat.shape
    f = feat.reshape(B, C, H * W)
    idx = jnp.broadcast_to(ind[:, None, :].astype(jnp.int32), (B, C, ind.shape[1]))
    g = jnp.take_along_axis(f, idx, axis=2)          # (B, C, M) -- tiny
    return jnp.transpose(g, (0, 2, 1))               # (B, M, C)


def _gather_peak_logits(hm_logits, ind, cat):
    """hm logits at (cat, ind) -> (B, M) raw logits (sigmoid applied in-kernel)."""
    B, C, H, W = hm_logits.shape
    f = hm_logits.reshape(B, C * H * W)
    flat = cat.astype(jnp.int32) * (H * W) + ind.astype(jnp.int32)
    return jnp.take_along_axis(f, flat, axis=1)      # (B, M)


# ----------------------------------------------------------------------------
# GenericLoss forward
# ----------------------------------------------------------------------------
class Args:
    def __init__(self, weights, heads, hm_l1_loss):
        self.weights = weights
        self.heads = heads
        self.hm_l1_loss = hm_l1_loss


def generic_loss_forward(outputs, batch, args):
    weights = args.weights
    n = float(len(weights))
    head_keys = list(weights.keys())          # one head per "stack", in order
    losses = {k: jnp.float32(0.0) for k in weights}

    hm_stats = None
    pos_logits = None
    pos_mask = None
    jobs = []                                  # (head, kind, pred, tgt, mask)

    for i, head in enumerate(head_keys):
        out = outputs[i]
        if head == 'hm':
            hm_stats = hm_pixel_losses(out, batch['hm'])
            pos_logits = _gather_peak_logits(out, batch['ind'], batch['cat'])
            pos_mask = batch['mask'].astype(jnp.float32)
        elif head in _REG_HEADS or head in _BAL_HEADS:
            kind = 'bal' if head in _BAL_HEADS else 'l1'
            pred = _gather_feat_nchw(out, batch['ind'])           # (B, M, C)
            tgt = batch[head]
            msk = batch[head + '_mask']
            if msk.ndim == pred.ndim - 1:                         # (B, M) -> (B, M, C)
                msk = msk[..., None]
            msk = jnp.broadcast_to(msk, pred.shape)
            jobs.append((head, kind, pred, tgt, msk))

    sums = fused_small_losses(pos_logits, pos_mask, jobs)

    o = 0
    if hm_stats is not None:
        neg_sum, pos_pix_sum, npos_pix = hm_stats
        # TODO(synk): reference HeatmapFocalLoss / RegBalancedL1Loss were not
        # provided; standard CornerNet focal over the full heatmap (batch['mask']
        # unused here) and Libra balanced-L1 are used.
        hm_floss = jnp.where(npos_pix == 0.0,
                             -neg_sum,
                             -(pos_pix_sum + neg_sum) / jnp.maximum(npos_pix, 1.0))
        pos_sum, num_pos = sums[0], sums[1]
        fast_focal = jnp.where(num_pos == 0.0,
                               -neg_sum,
                               -(pos_sum + neg_sum) / jnp.maximum(num_pos, 1.0))
        losses['hm'] = losses['hm'] + args.hm_l1_loss * hm_floss / n + fast_focal / n
        o = 2

    for k, (head, _kind, *_r) in enumerate(jobs):
        s, msum = sums[o + 2 * k], sums[o + 2 * k + 1]
        losses[head] = losses[head] + (s / (msum + 1e-4)) / n

    tot = jnp.float32(0.0)
    for head in args.heads:
        tot = tot + weights[head] * losses[head]
    losses['tot'] = tot
    return tot, losses


# ----------------------------------------------------------------------------
# Main
# ----------------------------------------------------------------------------
if __name__ == "__main__":
    B, C, H, W, M = 2, 4, 16, 16, 8   # C = num classes; M = max objects
    keys = iter(jax.random.split(jax.random.PRNGKey(0), 16))

    # Model outputs (one tensor per head, in weights-key order)
    hm_out = jax.random.normal(next(keys), (B, C, H, W), jnp.float32)
    reg_out = jax.random.normal(next(keys), (B, 2, H, W), jnp.float32)
    wh_out = jax.random.normal(next(keys), (B, 2, H, W), jnp.float32)
    outputs = [hm_out, reg_out, wh_out]

    # Ground-truth batch
    gt_hm = jax.random.uniform(next(keys), (B, C, H, W), jnp.float32, 0.0, 0.9)
    gt_hm = gt_hm.at[:, :, 4, 4].set(1.0)   # plant some peaks (gt == 1)
    ind = jax.random.randint(next(keys), (B, M), 0, H * W, jnp.int32)
    mask = (jax.random.uniform(next(keys), (B, M)) > 0.3).astype(jnp.float32)
    cat = jax.random.randint(next(keys), (B, M), 0, C, jnp.int32)
    reg_t = jax.random.normal(next(keys), (B, M, 2), jnp.float32)
    reg_mask = (jax.random.uniform(next(keys), (B, M, 2)) > 0.3).astype(jnp.float32)
    wh_t = jax.random.normal(next(keys), (B, M, 2), jnp.float32)
    wh_mask = (jax.random.uniform(next(keys), (B, M, 2)) > 0.3).astype(jnp.float32)

    batch = {
        'hm': gt_hm, 'ind': ind, 'mask': mask, 'cat': cat,
        'reg': reg_t, 'reg_mask': reg_mask,
        'wh': wh_t, 'wh_mask': wh_mask,
    }

    args = Args(weights={'hm': 1.0, 'reg': 1.0, 'wh': 0.1},
                heads=['hm', 'reg', 'wh'],
                hm_l1_loss=1.0)

    tot, losses = generic_loss_forward(outputs, batch, args)
    jax.block_until_ready(tot)
    print("KERNEL_OK")
</pallas_src>

<mosaic_0001>
module attributes {stable_mosaic.version = 11 : i64} {
  func.func @kernel(%arg0: i32, %arg1: i32, %arg2: memref<8x256xf32, #tpu.memory_space<vmem>>, %arg3: memref<8x256xf32, #tpu.memory_space<vmem>>, %arg4: memref<1x3x8x256xf32, #tpu.memory_space<vmem>>) attributes {dimension_semantics = [#tpu.dimension_semantics<parallel>, #tpu.dimension_semantics<arbitrary>], iteration_bounds = array<i64: 1, 1>, scalar_prefetch = 0 : i64, scratch_operands = 0 : i64, tpu.core_type = #tpu.core_type<tc>, window_params = [{transform_indices = @transform_0, window_bounds = array<i64: 8, 256>}, {transform_indices = @transform_1, window_bounds = array<i64: 8, 256>}, {transform_indices = @transform_2, window_bounds = array<i64: 1, 3, 8, 256>}]} {
    %c0_i32 = arith.constant 0 : i32
    %0 = arith.cmpi eq, %arg1, %c0_i32 : i32
    %1 = arith.extui %0 : i1 to i32
    %c0_i32_0 = arith.constant 0 : i32
    %2 = arith.cmpi ne, %1, %c0_i32_0 : i32
    scf.if %2 {
      %cst_39 = arith.constant 0.000000e+00 : f32
      %67 = vector.broadcast %cst_39 : f32 to vector<1x3x8x256xf32>
      %c0_40 = arith.constant 0 : index
      %c0_41 = arith.constant 0 : index
      %c0_42 = arith.constant 0 : index
      %c0_43 = arith.constant 0 : index
      %68 = vector.load %arg4[%c0_40, %c0_41, %c0_42, %c0_43] : memref<1x3x8x256xf32, #tpu.memory_space<vmem>>, vector<1x3x8x256xf32>
      tpu.vector_store %arg4[%c0_40, %c0_41, %c0_42, %c0_43], %67 {strides = array<i32>} : memref<1x3x8x256xf32, #tpu.memory_space<vmem>>, vector<1x3x8x256xf32>,
    } else {
    }
    %c0 = arith.constant 0 : index
    %c0_1 = arith.constant 0 : index
    %3 = vector.load %arg2[%c0, %c0_1] : memref<8x256xf32, #tpu.memory_space<vmem>>, vector<8x256xf32>
    %c0_2 = arith.constant 0 : index
    %c0_3 = arith.constant 0 : index
    %4 = vector.load %arg3[%c0_2, %c0_3] : memref<8x256xf32, #tpu.memory_space<vmem>>, vector<8x256xf32>
    %5 = math.absf %3 : vector<8x256xf32>
    %cst = arith.constant 0.000000e+00 : f32
    %6 = vector.broadcast %cst : f32 to vector<8x256xf32>
    %7 = arith.subf %6, %5 : vector<8x256xf32>
    %8 = math.exp %7 : vector<8x256xf32>
    %cst_4 = arith.constant 1.000000e+00 : f32
    %9 = vector.broadcast %cst_4 : f32 to vector<8x256xf32>
    %10 = arith.addf %9, %8 : vector<8x256xf32>
    %11 = math.log %10 : vector<8x256xf32>
    %cst_5 = arith.constant 0.000000e+00 : f32
    %12 = vector.broadcast %cst_5 : f32 to vector<8x256xf32>
    %13 = arith.subf %12, %3 : vector<8x256xf32>
    %cst_6 = arith.constant 0.000000e+00 : f32
    %14 = vector.broadcast %cst_6 : f32 to vector<8x256xf32>
    %15 = arith.maximumf %13, %14 : vector<8x256xf32>
    %16 = arith.addf %11, %15 : vector<8x256xf32>
    %cst_7 = arith.constant 0.000000e+00 : f32
    %17 = vector.broadcast %cst_7 : f32 to vector<8x256xf32>
    %18 = arith.subf %17, %16 : vector<8x256xf32>
    %cst_8 = arith.constant -9.21034049 : f32
    %cst_9 = arith.constant -1.000050e-04 : f32
    %19 = vector.broadcast %cst_8 : f32 to vector<8x256xf32>
    %20 = arith.maximumf %19, %18 : vector<8x256xf32>
    %21 = vector.broadcast %cst_9 : f32 to vector<8x256xf32>
    %22 = arith.minimumf %21, %20 : vector<8x256xf32>
    %cst_10 = arith.constant 0.000000e+00 : f32
    %23 = vector.broadcast %cst_10 : f32 to vector<8x256xf32>
    %24 = arith.maximumf %3, %23 : vector<8x256xf32>
    %25 = arith.addf %11, %24 : vector<8x256xf32>
    %cst_11 = arith.constant 0.000000e+00 : f32
    %26 = vector.broadcast %cst_11 : f32 to vector<8x256xf32>
    %27 = arith.subf %26, %25 : vector<8x256xf32>
    %cst_12 = arith.constant -9.21034049 : f32
    %cst_13 = arith.constant -1.000050e-04 : f32
    %28 = vector.broadcast %cst_12 : f32 to vector<8x256xf32>
    %29 = arith.maximumf %28, %27 : vector<8x256xf32>
    %30 = vector.broadcast %cst_13 : f32 to vector<8x256xf32>
    %31 = arith.minimumf %30, %29 : vector<8x256xf32>
    %32 = math.exp %22 : vector<8x256xf32>
    %cst_14 = arith.constant 1.000000e+00 : f32
    %33 = vector.broadcast %cst_14 : f32 to vector<8x256xf32>
    %34 = arith.subf %33, %4 : vector<8x256xf32>
    %35 = arith.mulf %34, %34 : vector<8x256xf32>
    %36 = arith.mulf %35, %35 : vector<8x256xf32>
    %cst_15 = arith.constant 1.000000e+00 : f32
    %37 = vector.broadcast %cst_15 : f32 to vector<8x256xf32>
    %38 = arith.cmpf oeq, %4, %37 : vector<8x256xf32>
    %39 = arith.extui %38 : vector<8x256xi1> to vector<8x256xi32>
    %40 = arith.sitofp %39 : vector<8x256xi32> to vector<8x256xf32>
    %41 = arith.mulf %31, %32 : vector<8x256xf32>
    %42 = arith.mulf %41, %32 : vector<8x256xf32>
    %43 = arith.mulf %42, %36 : vector<8x256xf32>
    %cst_16 = arith.constant 1.000000e+00 : f32
    %44 = vector.broadcast %cst_16 : f32 to vector<8x256xf32>
    %45 = arith.subf %44, %32 : vector<8x256xf32>
    %46 = arith.mulf %45, %45 : vector<8x256xf32>
    %47 = arith.mulf %22, %46 : vector<8x256xf32>
    %48 = arith.mulf %47, %40 : vector<8x256xf32>
    %c0_17 = arith.constant 0 : index
    %c0_18 = arith.constant 0 : index
    %c0_19 = arith.constant 0 : index
    %c0_20 = arith.constant 0 : index
    %49 = vector.load %arg4[%c0_17, %c0_18, %c0_19, %c0_20] : memref<1x3x8x256xf32, #tpu.memory_space<vmem>>, vector<1x1x8x256xf32>
    %50 = vector.shape_cast %49 : vector<1x1x8x256xf32> to vector<8x256xf32>
    %51 = arith.addf %50, %43 : vector<8x256xf32>
    %c0_21 = arith.constant 0 : index
    %c0_22 = arith.constant 0 : index
    %c0_23 = arith.constant 0 : index
    %c0_24 = arith.constant 0 : index
    %52 = vector.load %arg4[%c0_21, %c0_22, %c0_23, %c0_24] : memref<1x3x8x256xf32, #tpu.memory_space<vmem>>, vector<1x1x8x256xf32>
    %53 = vector.shape_cast %52 : vector<1x1x8x256xf32> to vector<8x256xf32>
    %54 = vector.shape_cast %51 : vector<8x256xf32> to vector<1x1x8x256xf32>
    tpu.vector_store %arg4[%c0_21, %c0_22, %c0_23, %c0_24], %54 {strides = array<i32>} : memref<1x3x8x256xf32, #tpu.memory_space<vmem>>, vector<1x1x8x256xf32>,
    %c0_25 = arith.constant 0 : index
    %c1 = arith.constant 1 : index
    %c0_26 = arith.constant 0 : index
    %c0_27 = arith.constant 0 : index
    %55 = vector.load %arg4[%c0_25, %c1, %c0_26, %c0_27] : memref<1x3x8x256xf32, #tpu.memory_space<vmem>>, vector<1x1x8x256xf32>
    %56 = vector.shape_cast %55 : vector<1x1x8x256xf32> to vector<8x256xf32>
    %57 = arith.addf %56, %48 : vector<8x256xf32>
    %c0_28 = arith.constant 0 : index
    %c1_29 = arith.constant 1 : index
    %c0_30 = arith.constant 0 : index
    %c0_31 = arith.constant 0 : index
    %58 = vector.load %arg4[%c0_28, %c1_29, %c0_30, %c0_31] : memref<1x3x8x256xf32, #tpu.memory_space<vmem>>, vector<1x1x8x256xf32>
    %59 = vector.shape_cast %58 : vector<1x1x8x256xf32> to vector<8x256xf32>
    %60 = vector.shape_cast %57 : vector<8x256xf32> to vector<1x1x8x256xf32>
    tpu.vector_store %arg4[%c0_28, %c1_29, %c0_30, %c0_31], %60 {strides = array<i32>} : memref<1x3x8x256xf32, #tpu.memory_space<vmem>>, vector<1x1x8x256xf32>,
    %c0_32 = arith.constant 0 : index
    %c2 = arith.constant 2 : index
    %c0_33 = arith.constant 0 : index
    %c0_34 = arith.constant 0 : index
    %61 = vector.load %arg4[%c0_32, %c2, %c0_33, %c0_34] : memref<1x3x8x256xf32, #tpu.memory_space<vmem>>, vector<1x1x8x256xf32>
    %62 = vector.shape_cast %61 : vector<1x1x8x256xf32> to vector<8x256xf32>
    %63 = arith.addf %62, %40 : vector<8x256xf32>
    %c0_35 = arith.constant 0 : index
    %c2_36 = arith.constant 2 : index
    %c0_37 = arith.constant 0 : index
    %c0_38 = arith.constant 0 : index
    %64 = vector.load %arg4[%c0_35, %c2_36, %c0_37, %c0_38] : memref<1x3x8x256xf32, #tpu.memory_space<vmem>>, vector<1x1x8x256xf32>
    %65 = vector.shape_cast %64 : vector<1x1x8x256xf32> to vector<8x256xf32>
    %66 = vector.shape_cast %63 : vector<8x256xf32> to vector<1x1x8x256xf32>
    tpu.vector_store %arg4[%c0_35, %c2_36, %c0_37, %c0_38], %66 {strides = array<i32>} : memref<1x3x8x256xf32, #tpu.memory_space<vmem>>, vector<1x1x8x256xf32>,
    return
  }
  func.func @transform_0(%arg0: i32, %arg1: i32) -> (i32, i32) {
    %c0_i32 = arith.constant 0 : i32
    return %arg0, %arg1 : i32, i32
  }
  func.func @transform_1(%arg0: i32, %arg1: i32) -> (i32, i32) {
    %c0_i32 = arith.constant 0 : i32
    return %arg0, %arg1 : i32, i32
  }
  func.func @transform_2(%arg0: i32, %arg1: i32) -> (i32, i32, i32, i32) {
    %c0_i32 = arith.constant 0 : i32
    %c0_i32_0 = arith.constant 0 : i32
    %c0_i32_1 = arith.constant 0 : i32
    %c0_i32_2 = arith.constant 0 : i32
    return %arg0, %c0_i32, %c0_i32_0, %c0_i32_1 : i32, i32, i32, i32
  }
}

</mosaic_0001>

<llo_original>
// kernel: tpu_custom_call.1
$region0: #{tpu_custom_call.1}
  #allocation0 [shape = 'u32[]', space=smem, size = 0x4, offset = 0x4, fixed_abs, tag = 'smem constant byte address 0x4 - core index']
  #allocation1 [shape = 'u32[144,128]{1,0:T(1,128)}', space=vmem, size = 0x12000, scoped, tag = 'internal scratch']
  %s0 = inlined_call_operand.hbm [shape: f32[8,256], index: 0, kind: input, shape index: {}]
  %s1 = inlined_call_operand.hbm [shape: f32[8,256], index: 1, kind: input, shape index: {}]
  %s2 = inlined_call_operand.hbm [shape: f32[1,3,8,256], index: 2, kind: output, shape index: {}]
  %s3 = sld [smem:[#allocation0]]
  $region30: #{tpu_custom_call.1} parent=0
    _
  %s5 = ssub.s32 1, %s3
  %s6 = scalar_select 0, %s5, %s3
  $region1: #{tpu_custom_call.1} parent=0
    #allocation2 [shape = 'u8[8192]{0}', space=vmem, size = 0x2000, scoped, tag = 'input window, operand 0, single buffered']
    #allocation3 [shape = 's32[1]{0}', space=sflag, size = 0x4, scoped, tag = 'scoped memory for tpu_custom_call.1']
    #allocation4 [shape = 's32[1]{0}', space=sflag, size = 0x4, scoped, tag = 'scoped memory for tpu_custom_call.1']
    #allocation5 [shape = 'u8[8192]{0}', space=vmem, size = 0x2000, scoped, tag = 'input window, operand 1, single buffered']
    #allocation6 [shape = 's32[1]{0}', space=sflag, size = 0x4, scoped, tag = 'scoped memory for tpu_custom_call.1']
    #allocation7 [shape = 'u8[24576]{0}', space=vmem, size = 0x6000, scoped, tag = 'output window, operand 0, single buffered']
    %7 = vsyncpa [#allocation3], 0
    %8 = vsyncpa [#allocation6], 0
    %9 = vsyncpa [#allocation4], 0
    // Predicated region
    $region2: #{tpu_custom_call.1} parent=1 // pred_check
      _
    $region3: #{tpu_custom_call.1} parent=1 // pred_check_branch
      %11 = sbr.rel (0) target = $region5
    $region4: #{tpu_custom_call.1} parent=1 // pred_region
      %s13 = ssub.s32 256, 256
      %14 = vsyncadd [#allocation3], %s13
      %s16 = sshll.u32 [#allocation2], 4
      %s17 = int_to_ptr.vmem [resolvable:$true] %s16
      %19 = dma.hbm_to_vmem [thread:$0]  %s0, 256, %s17, [#allocation3]
    $region5: #{tpu_custom_call.1} parent=1 // pred_fallthru
      _
    // Predicated region
    $region6: #{tpu_custom_call.1} parent=1 // pred_check
      _
    $region7: #{tpu_custom_call.1} parent=1 // pred_check_branch
      %21 = sbr.rel (0) target = $region9
    $region8: #{tpu_custom_call.1} parent=1 // pred_region
      %s23 = ssub.s32 256, 256
      %24 = vsyncadd [#allocation6], %s23
      %s26 = sshll.u32 [#allocation5], 4
      %s27 = int_to_ptr.vmem [resolvable:$true] %s26
      %29 = dma.hbm_to_vmem [thread:$0]  %s1, 256, %s27, [#allocation6]
    $region9: #{tpu_custom_call.1} parent=1 // pred_fallthru
      _
    // Predicated region
    $region10: #{tpu_custom_call.1} parent=1 // pred_check
      _
    $region11: #{tpu_custom_call.1} parent=1 // pred_check_branch
      %31 = sbr.rel (0) target = $region13
    $region12: #{tpu_custom_call.1} parent=1 // pred_region
      %32 = dma.done [#allocation3], 256
    $region13: #{tpu_custom_call.1} parent=1 // pred_fallthru
      _
    // Predicated region
    $region14: #{tpu_custom_call.1} parent=1 // pred_check
      _
    $region15: #{tpu_custom_call.1} parent=1 // pred_check_branch
      %34 = sbr.rel (0) target = $region17
    $region16: #{tpu_custom_call.1} parent=1 // pred_region
      %35 = dma.done [#allocation6], 256
    $region17: #{tpu_custom_call.1} parent=1 // pred_fallthru
      _
    %p36 = scmp.eq.s32.totalorder 0, 0
    // Predicated region
    $region18: #{tpu_custom_call.1} parent=1 // pred_check
      %p37 = pneg %p36
    $region19: #{tpu_custom_call.1} parent=1 // pred_check_branch
      %39 = sbr.rel (%p37) target = $region21
    $region20: #{tpu_custom_call.1} parent=1 // pred_region
      %40 = vst [vmem:[#allocation7] sm:$0xff] 0.0
      %41 = vst [vmem:[#allocation7 + $0x8] sm:$0xff] 0.0
      %42 = vst [vmem:[#allocation7 + $0x10] sm:$0xff] 0.0
      %43 = vst [vmem:[#allocation7 + $0x18] sm:$0xff] 0.0
      %44 = vst [vmem:[#allocation7 + $0x20] sm:$0xff] 0.0
      %45 = vst [vmem:[#allocation7 + $0x28] sm:$0xff] 0.0
    $region21: #{tpu_custom_call.1} parent=1 // pred_fallthru
      _
    %v46 = vld [vmem:[#allocation2] sm:$0xff]
    %v47 = vld [vmem:[#allocation2 + $0x8] sm:$0xff]
    %v48 = vld [vmem:[#allocation5] sm:$0xff]
    %v49 = vld [vmem:[#allocation5 + $0x8] sm:$0xff]
    %v50 = vand.u32 2147483647, %v46
    %v51 = vand.u32 2147483647, %v47
    %v52 = vsub.f32 0.0, %v50
    %v53 = vsub.f32 0.0, %v51
    %v54 = vmul.f32 %v52, 1.442695
    %v55 = vpow.pop %v54
    %v56 = vmul.f32 %v53, 1.442695
    %v57 = vpow.pop %v56
    %v58 = vadd.f32 %v55, 1.0
    %v59 = vadd.f32 %v57, 1.0
    %v60 = vlog2.pop %v58
    %v61 = vmul.f32 %v60, 0.6931472
    %v62 = vlog2.pop %v59
    %v63 = vmul.f32 %v62, 0.6931472
    %v64 = vsub.f32 0.0, %v46
    %v65 = vsub.f32 0.0, %v47
    %v66 = vmax.f32 %v64, 0.0
    %v67 = vmax.f32 %v65, 0.0
    %v68 = vadd.f32 %v61, %v66
    %v69 = vadd.f32 %v63, %v67
    %v70 = vsub.f32 0.0, %v68
    %v71 = vsub.f32 0.0, %v69
    %v72 = vmax.f32 %v70, -9.2103405
    %v73 = vmax.f32 %v71, -9.2103405
    %v74 = vmin.f32 %v72, -0.000100005
    %v75 = vmin.f32 %v73, -0.000100005
    %v76 = vmax.f32 %v46, 0.0
    %v77 = vmax.f32 %v47, 0.0
    %v78 = vadd.f32 %v61, %v76
    %v79 = vadd.f32 %v63, %v77
    %v80 = vsub.f32 0.0, %v78
    %v81 = vsub.f32 0.0, %v79
    %v82 = vmax.f32 %v80, -9.2103405
    %v83 = vmax.f32 %v81, -9.2103405
    %v84 = vmin.f32 %v82, -0.000100005
    %v85 = vmin.f32 %v83, -0.000100005
    %v86 = vmul.f32 %v74, 1.442695
    %v87 = vpow.pop %v86
    %v88 = vmul.f32 %v75, 1.442695
    %v89 = vpow.pop %v88
    %v90 = vsub.f32 1.0, %v48
    %v91 = vsub.f32 1.0, %v49
    %v92 = vmul.f32 %v90, %v90
    %v93 = vmul.f32 %v91, %v91
    %v94 = vmul.f32 %v92, %v92
    %v95 = vmul.f32 %v93, %v93
    %vm96 = vcmp.eq.f32.partialorder %v48, 1.0
    %vm97 = vcmp.eq.f32.partialorder %v49, 1.0
    %v98 = vsel %vm96, 1, 0
    %v99 = vsel %vm97, 1, 0
    %v100 = vcvt.s32.f32 %v98
    %v101 = vcvt.s32.f32 %v99
    %v102 = vmul.f32 %v84, %v87
    %v103 = vmul.f32 %v85, %v89
    %v104 = vmul.f32 %v102, %v87
    %v105 = vmul.f32 %v103, %v89
    %v106 = vmul.f32 %v104, %v94
    %v107 = vmul.f32 %v105, %v95
    %v108 = vsub.f32 1.0, %v87
    %v109 = vsub.f32 1.0, %v89
    %v110 = vmul.f32 %v108, %v108
    %v111 = vmul.f32 %v109, %v109
    %v112 = vmul.f32 %v74, %v110
    %v113 = vmul.f32 %v75, %v111
    %v114 = vmul.f32 %v112, %v100
    %v115 = vmul.f32 %v113, %v101
    %v116 = vld [vmem:[#allocation7] sm:$0xff]
    %v117 = vld [vmem:[#allocation7 + $0x8] sm:$0xff]
    %v118 = vadd.f32 %v116, %v106
    %v119 = vadd.f32 %v117, %v107
    %120 = vst [vmem:[#allocation7] sm:$0xff] %v118
    %121 = vst [vmem:[#allocation7 + $0x8] sm:$0xff] %v119
    %s122 = scalar_lea.vmem [#allocation7], 16
    %v123 = vld [vmem:[%s122] sm:$0xff]
    %v124 = vld [vmem:[%s122 + $0x8] sm:$0xff]
    %v125 = vadd.f32 %v123, %v114
    %v126 = vadd.f32 %v124, %v115
    %127 = vst [vmem:[%s122] sm:$0xff] %v125
    %128 = vst [vmem:[%s122 + $0x8] sm:$0xff] %v126
    %s129 = scalar_lea.vmem [#allocation7], 32
    %v130 = vld [vmem:[%s129] sm:$0xff]
    %v131 = vld [vmem:[%s129 + $0x8] sm:$0xff]
    %v132 = vadd.f32 %v130, %v100
    %v133 = vadd.f32 %v131, %v101
    %134 = vst [vmem:[%s129] sm:$0xff] %v132
    %135 = vst [vmem:[%s129 + $0x8] sm:$0xff] %v133
    // Predicated region
    $region22: #{tpu_custom_call.1} parent=1 // pred_check
      _
    $region23: #{tpu_custom_call.1} parent=1 // pred_check_branch
      %137 = sbr.rel (0) target = $region25
    $region24: #{tpu_custom_call.1} parent=1 // pred_region
      %s139 = ssub.s32 768, 768
      %140 = vsyncadd [#allocation4], %s139
      %s141 = sshll.u32 [#allocation7], 4
      %s142 = int_to_ptr.vmem [resolvable:$true] %s141
      %147 = dma.vmem_to_hbm [thread:$0]  %s142, 768, %s2, [#allocation4], 256, 256, 16
    $region25: #{tpu_custom_call.1} parent=1 // pred_fallthru
      _
    // Predicated region
    $region26: #{tpu_custom_call.1} parent=1 // pred_check
      _
    $region27: #{tpu_custom_call.1} parent=1 // pred_check_branch
      %149 = sbr.rel (0) target = $region29
    $region28: #{tpu_custom_call.1} parent=1 // pred_region
      %150 = dma.done [#allocation4], 768
    $region29: #{tpu_custom_call.1} parent=1 // pred_fallthru
      _
    %151 = vsyncpa [#allocation3], 1
    %152 = vsyncpa [#allocation6], 1
    %153 = vsyncpa [#allocation4], 1

</llo_original>
